<compile_context>
chip_gen: v5e
topology: v5e:2x2
jax: 0.10.0
libtpu: 0.0.40
codegen_flags: <defaults>
</compile_context>

<pallas_src>
import functools

import jax
import jax.numpy as jnp
from jax.experimental import pallas as pl
from jax.experimental.pallas import tpu as pltpu


def _fused_block_kernel(x_ref, *rest, H, W, dilations, neg_slope, Bblk):
    """Fused (3x3 "same" conv + LeakyReLU) x n_layers for Bblk images.

    x_ref : (Bblk, Cin, H*W)  images in flattened-NCHW (channels on sublanes,
            merged pixels on the 128-lane axis).
    rest  : n packed weight refs, each (Cout_i, 9*Cin_i) bf16 with tap-major
            ordering col = (kh*3 + kw)*Cin + cin, followed by the output ref
            (Bblk, Cout, H*W).
    Layer i uses padding == dilation == dilations[i] (matches Conv2d pad=1/d=1
    and AtrousConv2d pad=dilation).
    """
    w_refs = rest[:-1]
    o_ref = rest[-1]
    HW = H * W

    # Pixel coordinates along the lane axis (hoisted out of all loops).
    q = jax.lax.broadcasted_iota(jnp.int32, (1, HW), 1)   # merged pixel index h*W + w
    w_col = q & (W - 1)                                    # pixel column (W is a power of 2)

    # Load the packed weights once (tiny, lane-dense, bf16).
    ws = [w_ref[...] for w_ref in w_refs]

    def layer(x, w_packed, d):
        """x: (K, HW) f32.  w_packed: (Cout, 9*K) bf16.  pad == dilation == d."""
        taps = []
        for kh in range(3):
            for kw in range(3):
                dh = kh * d - d                 # row offset of this tap: -d, 0, +d
                dw = kw * d - d                 # col offset of this tap: -d, 0, +d
                shift = (-(dh * W + dw)) % HW
                # xt[:, q] = x[:, q + dh*W + dw (mod HW)] -- cyclic lane rotation (XLU).
                xt = pltpu.roll(x, shift, 1) if shift != 0 else x
                # Zero lanes whose source pixel is outside the image: implements the
                # conv zero-padding and masks the cyclic wrap of roll.
                conds = []
                if dh < 0:
                    conds.append(q >= (-dh) * W)        # source row >= 0
                if dh > 0:
                    conds.append(q < (H - dh) * W)      # source row < H
                if dw < 0:
                    conds.append(w_col >= -dw)          # source col >= 0
                if dw > 0:
                    conds.append(w_col < W - dw)        # source col < W
                if conds:
                    valid = functools.reduce(lambda a, b: a & b, conds)
                    xt = jnp.where(valid, xt, 0.0)
                taps.append(xt)
        # In-vreg im2col: (9*K, HW).  Single deep-K MXU dot, f32 accumulation.
        stacked = jnp.concatenate(taps, axis=0)
        y = jnp.dot(w_packed, stacked.astype(w_packed.dtype),
                    preferred_element_type=jnp.float32)          # (Cout, HW) f32
        return jnp.maximum(y, neg_slope * y)                      # LeakyReLU(neg_slope)

    for b in range(Bblk):                                         # small, unrolled
        y = x_ref[b].astype(jnp.float32)                          # (Cin, HW)
        for w_packed, d in zip(ws, dilations):
            y = layer(y, w_packed, d)
        o_ref[b] = y.astype(o_ref.dtype)                          # lane-dense store


def prepare_params(params_oihw):
    """Repack PyTorch OIHW conv weights once to the exact MXU operand layout.

    (O, I, 3, 3) -> (O, 9*I) bf16 with column ordering (kh*3 + kw)*I + i,
    matching the tap-stacking order used inside the kernel.
    """
    packed = []
    for w in params_oihw:
        w = jnp.asarray(w, jnp.float32)
        O, I = w.shape[0], w.shape[1]
        wp = jnp.transpose(w, (0, 2, 3, 1)).reshape(O, 9 * I)   # (O, kh, kw, I) -> (O, 9I)
        packed.append(wp.astype(jnp.bfloat16))
    return tuple(packed)


def _pick_batch_block(B, max_bblk=8):
    """Images per grid step; keeps >= 2 grid blocks when B >= 2 (v7x megacore)."""
    desired = min(max_bblk, max(1, B // 2))
    for bblk in range(desired, 0, -1):
        if B % bblk == 0:
            return bblk
    return 1


def atrous_vggnet_block(x_nchw, prepped_weights, *, dilation=2, neg_slope=0.1):
    """Forward pass of AtrousVGGNetBlock.

    x_nchw          : (N, C, H, W) float32 (PyTorch layout).
    prepped_weights : output of prepare_params(); all layers are 3x3 / stride 1 /
                      bias-free; every layer but the last uses dilation=1 (pad 1),
                      the last uses `dilation` (pad = dilation).
    Returns (N, K, H, W) float32.
    """
    B, Cin, H, W = x_nchw.shape
    HW = H * W
    n_layers = len(prepped_weights)
    Cout = prepped_weights[-1].shape[0]
    assert W & (W - 1) == 0, "kernel assumes W is a power of two (lane-mask bit trick)"
    assert HW % 128 == 0, "kernel assumes H*W is a multiple of 128 (lane-dense layout)"
    dilations = tuple([1] * (n_layers - 1) + [dilation])

    Bblk = _pick_batch_block(B)
    x_flat = x_nchw.reshape(B, Cin, HW)   # free reshape: flattened NCHW

    kernel = functools.partial(
        _fused_block_kernel, H=H, W=W, dilations=dilations,
        neg_slope=neg_slope, Bblk=Bblk)

    in_specs = [pl.BlockSpec((Bblk, Cin, HW), lambda b: (b, 0, 0))]
    for w in prepped_weights:
        in_specs.append(pl.BlockSpec(w.shape, lambda b: (0, 0)))

    out_flat = pl.pallas_call(
        kernel,
        out_shape=jax.ShapeDtypeStruct((B, Cout, HW), x_nchw.dtype),
        grid=(B // Bblk,),
        in_specs=in_specs,
        out_specs=pl.BlockSpec((Bblk, Cout, HW), lambda b: (b, 0, 0)),
        compiler_params=pltpu.CompilerParams(
            dimension_semantics=("parallel",)),
    )(x_flat, *prepped_weights)

    return out_flat.reshape(B, Cout, H, W)


def _kaiming_uniform_conv_weight(key, out_c, in_c, k):
    # PyTorch default Conv2d init (kaiming_uniform_ with a=sqrt(5)) reduces to
    # U(-1/sqrt(fan_in), 1/sqrt(fan_in)) with fan_in = in_c * k * k.
    fan_in = in_c * k * k
    bound = 1.0 / jnp.sqrt(jnp.float32(fan_in))
    return jax.random.uniform(
        key, (out_c, in_c, k, k), dtype=jnp.float32, minval=-bound, maxval=bound)


if __name__ == "__main__":
    # AtrousVGGNetBlock(in_channels=4, out_channels=8, n_convolution=2, dilation=2)
    B, Cin, H, W = 2, 4, 16, 16
    Cout = 8
    n_convolution = 2
    dilation = 2
    neg_slope = 0.1

    key = jax.random.PRNGKey(0)
    k_x, k_w0, k_w1 = jax.random.split(key, 3)
    x = jax.random.normal(k_x, (B, Cin, H, W), dtype=jnp.float32)

    # Layer 0: Conv2d(Cin -> Cout, 3x3); Layer 1: AtrousConv2d(Cout -> Cout, 3x3, d=2)
    w0 = _kaiming_uniform_conv_weight(k_w0, Cout, Cin, 3)   # OIHW
    w1 = _kaiming_uniform_conv_weight(k_w1, Cout, Cout, 3)  # OIHW
    params = [w0, w1]
    assert len(params) == n_convolution

    prepped = prepare_params(params)     # hoisted: packing + bf16 cast done once
    fwd = jax.jit(functools.partial(
        atrous_vggnet_block, dilation=dilation, neg_slope=neg_slope))
    out = jax.block_until_ready(fwd(x, prepped))

    # Reference (same semantics as PyTorch Conv2d(bias=False) + LeakyReLU(0.1)), f32.
    def ref_forward(x_nchw):
        y = x_nchw
        for i, w in enumerate(params):
            d = dilation if i == len(params) - 1 else 1
            y = jax.lax.conv_general_dilated(
                y, w, window_strides=(1, 1), padding=[(d, d), (d, d)],
                rhs_dilation=(d, d),
                dimension_numbers=("NCHW", "OIHW", "NCHW"))
            y = jnp.where(y >= 0, y, neg_slope * y)
        return y

    ref = jax.block_until_ready(ref_forward(x))
    assert out.shape == (B, Cout, H, W), out.shape
    # Tolerance loosened for bf16 MXU operands (f32 accumulation); errors are ~1e-3.
    err = float(jnp.max(jnp.abs(out - ref)))
    assert jnp.allclose(out, ref, atol=2e-2, rtol=2e-2), err

    print("KERNEL_OK")
</pallas_src>

<mosaic_0001>
module attributes {stable_mosaic.version = 11 : i64} {
  func.func @_fused_block_kernel(%arg0: i32, %arg1: memref<1x4x256xf32, #tpu.memory_space<vmem>>, %arg2: memref<8x36xbf16, #tpu.memory_space<vmem>>, %arg3: memref<8x72xbf16, #tpu.memory_space<vmem>>, %arg4: memref<1x8x256xf32, #tpu.memory_space<vmem>>) attributes {dimension_semantics = [#tpu.dimension_semantics<parallel>], iteration_bounds = array<i64: 2>, scalar_prefetch = 0 : i64, scratch_operands = 0 : i64, tpu.core_type = #tpu.core_type<tc>, window_params = [{transform_indices = @transform_0, window_bounds = array<i64: 1, 4, 256>}, {pipeline_mode = #tpu.pipeline_mode<synchronous>, transform_indices = @transform_1, window_bounds = array<i64: 8, 36>}, {pipeline_mode = #tpu.pipeline_mode<synchronous>, transform_indices = @transform_2, window_bounds = array<i64: 8, 72>}, {transform_indices = @transform_3, window_bounds = array<i64: 1, 8, 256>}]} {
    %0 = tpu.iota {dimensions = array<i32: 1>} : vector<1x256xi32>
    %c15_i32 = arith.constant 15 : i32
    %1 = vector.broadcast %c15_i32 : i32 to vector<1x256xi32>
    %2 = arith.andi %0, %1 : vector<1x256xi32>
    %c0 = arith.constant 0 : index
    %c0_0 = arith.constant 0 : index
    %3 = vector.load %arg2[%c0, %c0_0] : memref<8x36xbf16, #tpu.memory_space<vmem>>, vector<8x36xbf16>
    %c0_1 = arith.constant 0 : index
    %c0_2 = arith.constant 0 : index
    %4 = vector.load %arg3[%c0_1, %c0_2] : memref<8x72xbf16, #tpu.memory_space<vmem>>, vector<8x72xbf16>
    %c0_3 = arith.constant 0 : index
    %c0_4 = arith.constant 0 : index
    %c0_5 = arith.constant 0 : index
    %5 = vector.load %arg1[%c0_3, %c0_4, %c0_5] : memref<1x4x256xf32, #tpu.memory_space<vmem>>, vector<1x4x256xf32>
    %6 = vector.shape_cast %5 : vector<1x4x256xf32> to vector<4x256xf32>
    %c17_i32 = arith.constant 17 : i32
    %7 = tpu.dynamic_rotate %6 by %c17_i32 dim 1 : vector<4x256xf32>, i32 -> vector<4x256xf32>
    %c16_i32 = arith.constant 16 : i32
    %8 = vector.broadcast %c16_i32 : i32 to vector<1x256xi32>
    %9 = arith.cmpi sge, %0, %8 : vector<1x256xi32>
    %c1_i32 = arith.constant 1 : i32
    %10 = vector.broadcast %c1_i32 : i32 to vector<1x256xi32>
    %11 = arith.cmpi sge, %2, %10 : vector<1x256xi32>
    %12 = arith.andi %9, %11 : vector<1x256xi1>
    %cst = arith.constant 0.000000e+00 : f32
    %13 = vector.shape_cast %12 : vector<1x256xi1> to vector<1x256xi1>
    %14 = vector.broadcast %13 : vector<1x256xi1> to vector<4x256xi1>
    %15 = vector.broadcast %cst : f32 to vector<4x256xf32>
    %16 = arith.select %14, %7, %15 : vector<4x256xi1>, vector<4x256xf32>
    %c16_i32_6 = arith.constant 16 : i32
    %17 = tpu.dynamic_rotate %6 by %c16_i32_6 dim 1 : vector<4x256xf32>, i32 -> vector<4x256xf32>
    %c16_i32_7 = arith.constant 16 : i32
    %18 = vector.broadcast %c16_i32_7 : i32 to vector<1x256xi32>
    %19 = arith.cmpi sge, %0, %18 : vector<1x256xi32>
    %cst_8 = arith.constant 0.000000e+00 : f32
    %20 = vector.shape_cast %19 : vector<1x256xi1> to vector<1x256xi1>
    %21 = vector.broadcast %20 : vector<1x256xi1> to vector<4x256xi1>
    %22 = vector.broadcast %cst_8 : f32 to vector<4x256xf32>
    %23 = arith.select %21, %17, %22 : vector<4x256xi1>, vector<4x256xf32>
    %c15_i32_9 = arith.constant 15 : i32
    %24 = tpu.dynamic_rotate %6 by %c15_i32_9 dim 1 : vector<4x256xf32>, i32 -> vector<4x256xf32>
    %c16_i32_10 = arith.constant 16 : i32
    %25 = vector.broadcast %c16_i32_10 : i32 to vector<1x256xi32>
    %26 = arith.cmpi sge, %0, %25 : vector<1x256xi32>
    %c15_i32_11 = arith.constant 15 : i32
    %27 = vector.broadcast %c15_i32_11 : i32 to vector<1x256xi32>
    %28 = arith.cmpi slt, %2, %27 : vector<1x256xi32>
    %29 = arith.andi %26, %28 : vector<1x256xi1>
    %cst_12 = arith.constant 0.000000e+00 : f32
    %30 = vector.shape_cast %29 : vector<1x256xi1> to vector<1x256xi1>
    %31 = vector.broadcast %30 : vector<1x256xi1> to vector<4x256xi1>
    %32 = vector.broadcast %cst_12 : f32 to vector<4x256xf32>
    %33 = arith.select %31, %24, %32 : vector<4x256xi1>, vector<4x256xf32>
    %c1_i32_13 = arith.constant 1 : i32
    %34 = tpu.dynamic_rotate %6 by %c1_i32_13 dim 1 : vector<4x256xf32>, i32 -> vector<4x256xf32>
    %c1_i32_14 = arith.constant 1 : i32
    %35 = vector.broadcast %c1_i32_14 : i32 to vector<1x256xi32>
    %36 = arith.cmpi sge, %2, %35 : vector<1x256xi32>
    %cst_15 = arith.constant 0.000000e+00 : f32
    %37 = vector.shape_cast %36 : vector<1x256xi1> to vector<1x256xi1>
    %38 = vector.broadcast %37 : vector<1x256xi1> to vector<4x256xi1>
    %39 = vector.broadcast %cst_15 : f32 to vector<4x256xf32>
    %40 = arith.select %38, %34, %39 : vector<4x256xi1>, vector<4x256xf32>
    %c255_i32 = arith.constant 255 : i32
    %41 = tpu.dynamic_rotate %6 by %c255_i32 dim 1 : vector<4x256xf32>, i32 -> vector<4x256xf32>
    %c15_i32_16 = arith.constant 15 : i32
    %42 = vector.broadcast %c15_i32_16 : i32 to vector<1x256xi32>
    %43 = arith.cmpi slt, %2, %42 : vector<1x256xi32>
    %cst_17 = arith.constant 0.000000e+00 : f32
    %44 = vector.shape_cast %43 : vector<1x256xi1> to vector<1x256xi1>
    %45 = vector.broadcast %44 : vector<1x256xi1> to vector<4x256xi1>
    %46 = vector.broadcast %cst_17 : f32 to vector<4x256xf32>
    %47 = arith.select %45, %41, %46 : vector<4x256xi1>, vector<4x256xf32>
    %c241_i32 = arith.constant 241 : i32
    %48 = tpu.dynamic_rotate %6 by %c241_i32 dim 1 : vector<4x256xf32>, i32 -> vector<4x256xf32>
    %c240_i32 = arith.constant 240 : i32
    %49 = vector.broadcast %c240_i32 : i32 to vector<1x256xi32>
    %50 = arith.cmpi slt, %0, %49 : vector<1x256xi32>
    %c1_i32_18 = arith.constant 1 : i32
    %51 = vector.broadcast %c1_i32_18 : i32 to vector<1x256xi32>
    %52 = arith.cmpi sge, %2, %51 : vector<1x256xi32>
    %53 = arith.andi %50, %52 : vector<1x256xi1>
    %cst_19 = arith.constant 0.000000e+00 : f32
    %54 = vector.shape_cast %53 : vector<1x256xi1> to vector<1x256xi1>
    %55 = vector.broadcast %54 : vector<1x256xi1> to vector<4x256xi1>
    %56 = vector.broadcast %cst_19 : f32 to vector<4x256xf32>
    %57 = arith.select %55, %48, %56 : vector<4x256xi1>, vector<4x256xf32>
    %c240_i32_20 = arith.constant 240 : i32
    %58 = tpu.dynamic_rotate %6 by %c240_i32_20 dim 1 : vector<4x256xf32>, i32 -> vector<4x256xf32>
    %c240_i32_21 = arith.constant 240 : i32
    %59 = vector.broadcast %c240_i32_21 : i32 to vector<1x256xi32>
    %60 = arith.cmpi slt, %0, %59 : vector<1x256xi32>
    %cst_22 = arith.constant 0.000000e+00 : f32
    %61 = vector.shape_cast %60 : vector<1x256xi1> to vector<1x256xi1>
    %62 = vector.broadcast %61 : vector<1x256xi1> to vector<4x256xi1>
    %63 = vector.broadcast %cst_22 : f32 to vector<4x256xf32>
    %64 = arith.select %62, %58, %63 : vector<4x256xi1>, vector<4x256xf32>
    %c239_i32 = arith.constant 239 : i32
    %65 = tpu.dynamic_rotate %6 by %c239_i32 dim 1 : vector<4x256xf32>, i32 -> vector<4x256xf32>
    %c240_i32_23 = arith.constant 240 : i32
    %66 = vector.broadcast %c240_i32_23 : i32 to vector<1x256xi32>
    %67 = arith.cmpi slt, %0, %66 : vector<1x256xi32>
    %c15_i32_24 = arith.constant 15 : i32
    %68 = vector.broadcast %c15_i32_24 : i32 to vector<1x256xi32>
    %69 = arith.cmpi slt, %2, %68 : vector<1x256xi32>
    %70 = arith.andi %67, %69 : vector<1x256xi1>
    %cst_25 = arith.constant 0.000000e+00 : f32
    %71 = vector.shape_cast %70 : vector<1x256xi1> to vector<1x256xi1>
    %72 = vector.broadcast %71 : vector<1x256xi1> to vector<4x256xi1>
    %73 = vector.broadcast %cst_25 : f32 to vector<4x256xf32>
    %74 = arith.select %72, %65, %73 : vector<4x256xi1>, vector<4x256xf32>
    %75 = tpu.concatenate %16, %23, %33, %40, %6, %47, %57, %64, %74 in 0 : vector<4x256xf32>, vector<4x256xf32>, vector<4x256xf32>, vector<4x256xf32>, vector<4x256xf32>, vector<4x256xf32>, vector<4x256xf32>, vector<4x256xf32>, vector<4x256xf32> -> vector<36x256xf32>
    %76 = arith.truncf %75 : vector<36x256xf32> to vector<36x256xbf16>
    %cst_26 = arith.constant dense<0.000000e+00> : vector<8x256xf32>
    %77 = tpu.matmul %3, %76, %cst_26 {dimension_numbers = #tpu.dot_dimension_numbers<[1], [0], [0], [1], [0, 0, 1, 1], [], []>} : vector<8x36xbf16>, vector<36x256xbf16>, vector<8x256xf32> -> vector<8x256xf32>
    %cst_27 = arith.constant 1.000000e-01 : f32
    %78 = vector.broadcast %cst_27 : f32 to vector<8x256xf32>
    %79 = arith.mulf %78, %77 : vector<8x256xf32>
    %80 = arith.maximumf %77, %79 : vector<8x256xf32>
    %c34_i32 = arith.constant 34 : i32
    %81 = tpu.dynamic_rotate %80 by %c34_i32 dim 1 : vector<8x256xf32>, i32 -> vector<8x256xf32>
    %c32_i32 = arith.constant 32 : i32
    %82 = vector.broadcast %c32_i32 : i32 to vector<1x256xi32>
    %83 = arith.cmpi sge, %0, %82 : vector<1x256xi32>
    %c2_i32 = arith.constant 2 : i32
    %84 = vector.broadcast %c2_i32 : i32 to vector<1x256xi32>
    %85 = arith.cmpi sge, %2, %84 : vector<1x256xi32>
    %86 = arith.andi %83, %85 : vector<1x256xi1>
    %cst_28 = arith.constant 0.000000e+00 : f32
    %87 = vector.shape_cast %86 : vector<1x256xi1> to vector<1x256xi1>
    %88 = vector.broadcast %87 : vector<1x256xi1> to vector<8x256xi1>
    %89 = vector.broadcast %cst_28 : f32 to vector<8x256xf32>
    %90 = arith.select %88, %81, %89 : vector<8x256xi1>, vector<8x256xf32>
    %c32_i32_29 = arith.constant 32 : i32
    %91 = tpu.dynamic_rotate %80 by %c32_i32_29 dim 1 : vector<8x256xf32>, i32 -> vector<8x256xf32>
    %c32_i32_30 = arith.constant 32 : i32
    %92 = vector.broadcast %c32_i32_30 : i32 to vector<1x256xi32>
    %93 = arith.cmpi sge, %0, %92 : vector<1x256xi32>
    %cst_31 = arith.constant 0.000000e+00 : f32
    %94 = vector.shape_cast %93 : vector<1x256xi1> to vector<1x256xi1>
    %95 = vector.broadcast %94 : vector<1x256xi1> to vector<8x256xi1>
    %96 = vector.broadcast %cst_31 : f32 to vector<8x256xf32>
    %97 = arith.select %95, %91, %96 : vector<8x256xi1>, vector<8x256xf32>
    %c30_i32 = arith.constant 30 : i32
    %98 = tpu.dynamic_rotate %80 by %c30_i32 dim 1 : vector<8x256xf32>, i32 -> vector<8x256xf32>
    %c32_i32_32 = arith.constant 32 : i32
    %99 = vector.broadcast %c32_i32_32 : i32 to vector<1x256xi32>
    %100 = arith.cmpi sge, %0, %99 : vector<1x256xi32>
    %c14_i32 = arith.constant 14 : i32
    %101 = vector.broadcast %c14_i32 : i32 to vector<1x256xi32>
    %102 = arith.cmpi slt, %2, %101 : vector<1x256xi32>
    %103 = arith.andi %100, %102 : vector<1x256xi1>
    %cst_33 = arith.constant 0.000000e+00 : f32
    %104 = vector.shape_cast %103 : vector<1x256xi1> to vector<1x256xi1>
    %105 = vector.broadcast %104 : vector<1x256xi1> to vector<8x256xi1>
    %106 = vector.broadcast %cst_33 : f32 to vector<8x256xf32>
    %107 = arith.select %105, %98, %106 : vector<8x256xi1>, vector<8x256xf32>
    %c2_i32_34 = arith.constant 2 : i32
    %108 = tpu.dynamic_rotate %80 by %c2_i32_34 dim 1 : vector<8x256xf32>, i32 -> vector<8x256xf32>
    %c2_i32_35 = arith.constant 2 : i32
    %109 = vector.broadcast %c2_i32_35 : i32 to vector<1x256xi32>
    %110 = arith.cmpi sge, %2, %109 : vector<1x256xi32>
    %cst_36 = arith.constant 0.000000e+00 : f32
    %111 = vector.shape_cast %110 : vector<1x256xi1> to vector<1x256xi1>
    %112 = vector.broadcast %111 : vector<1x256xi1> to vector<8x256xi1>
    %113 = vector.broadcast %cst_36 : f32 to vector<8x256xf32>
    %114 = arith.select %112, %108, %113 : vector<8x256xi1>, vector<8x256xf32>
    %c254_i32 = arith.constant 254 : i32
    %115 = tpu.dynamic_rotate %80 by %c254_i32 dim 1 : vector<8x256xf32>, i32 -> vector<8x256xf32>
    %c14_i32_37 = arith.constant 14 : i32
    %116 = vector.broadcast %c14_i32_37 : i32 to vector<1x256xi32>
    %117 = arith.cmpi slt, %2, %116 : vector<1x256xi32>
    %cst_38 = arith.constant 0.000000e+00 : f32
    %118 = vector.shape_cast %117 : vector<1x256xi1> to vector<1x256xi1>
    %119 = vector.broadcast %118 : vector<1x256xi1> to vector<8x256xi1>
    %120 = vector.broadcast %cst_38 : f32 to vector<8x256xf32>
    %121 = arith.select %119, %115, %120 : vector<8x256xi1>, vector<8x256xf32>
    %c226_i32 = arith.constant 226 : i32
    %122 = tpu.dynamic_rotate %80 by %c226_i32 dim 1 : vector<8x256xf32>, i32 -> vector<8x256xf32>
    %c224_i32 = arith.constant 224 : i32
    %123 = vector.broadcast %c224_i32 : i32 to vector<1x256xi32>
    %124 = arith.cmpi slt, %0, %123 : vector<1x256xi32>
    %c2_i32_39 = arith.constant 2 : i32
    %125 = vector.broadcast %c2_i32_39 : i32 to vector<1x256xi32>
    %126 = arith.cmpi sge, %2, %125 : vector<1x256xi32>
    %127 = arith.andi %124, %126 : vector<1x256xi1>
    %cst_40 = arith.constant 0.000000e+00 : f32
    %128 = vector.shape_cast %127 : vector<1x256xi1> to vector<1x256xi1>
    %129 = vector.broadcast %128 : vector<1x256xi1> to vector<8x256xi1>
    %130 = vector.broadcast %cst_40 : f32 to vector<8x256xf32>
    %131 = arith.select %129, %122, %130 : vector<8x256xi1>, vector<8x256xf32>
    %c224_i32_41 = arith.constant 224 : i32
    %132 = tpu.dynamic_rotate %80 by %c224_i32_41 dim 1 : vector<8x256xf32>, i32 -> vector<8x256xf32>
    %c224_i32_42 = arith.constant 224 : i32
    %133 = vector.broadcast %c224_i32_42 : i32 to vector<1x256xi32>
    %134 = arith.cmpi slt, %0, %133 : vector<1x256xi32>
    %cst_43 = arith.constant 0.000000e+00 : f32
    %135 = vector.shape_cast %134 : vector<1x256xi1> to vector<1x256xi1>
    %136 = vector.broadcast %135 : vector<1x256xi1> to vector<8x256xi1>
    %137 = vector.broadcast %cst_43 : f32 to vector<8x256xf32>
    %138 = arith.select %136, %132, %137 : vector<8x256xi1>, vector<8x256xf32>
    %c222_i32 = arith.constant 222 : i32
    %139 = tpu.dynamic_rotate %80 by %c222_i32 dim 1 : vector<8x256xf32>, i32 -> vector<8x256xf32>
    %c224_i32_44 = arith.constant 224 : i32
    %140 = vector.broadcast %c224_i32_44 : i32 to vector<1x256xi32>
    %141 = arith.cmpi slt, %0, %140 : vector<1x256xi32>
    %c14_i32_45 = arith.constant 14 : i32
    %142 = vector.broadcast %c14_i32_45 : i32 to vector<1x256xi32>
    %143 = arith.cmpi slt, %2, %142 : vector<1x256xi32>
    %144 = arith.andi %141, %143 : vector<1x256xi1>
    %cst_46 = arith.constant 0.000000e+00 : f32
    %145 = vector.shape_cast %144 : vector<1x256xi1> to vector<1x256xi1>
    %146 = vector.broadcast %145 : vector<1x256xi1> to vector<8x256xi1>
    %147 = vector.broadcast %cst_46 : f32 to vector<8x256xf32>
    %148 = arith.select %146, %139, %147 : vector<8x256xi1>, vector<8x256xf32>
    %149 = tpu.concatenate %90, %97, %107, %114, %80, %121, %131, %138, %148 in 0 : vector<8x256xf32>, vector<8x256xf32>, vector<8x256xf32>, vector<8x256xf32>, vector<8x256xf32>, vector<8x256xf32>, vector<8x256xf32>, vector<8x256xf32>, vector<8x256xf32> -> vector<72x256xf32>
    %150 = arith.truncf %149 : vector<72x256xf32> to vector<72x256xbf16>
    %cst_47 = arith.constant dense<0.000000e+00> : vector<8x256xf32>
    %151 = tpu.matmul %4, %150, %cst_47 {dimension_numbers = #tpu.dot_dimension_numbers<[1], [0], [0], [1], [0, 0, 1, 1], [], []>} : vector<8x72xbf16>, vector<72x256xbf16>, vector<8x256xf32> -> vector<8x256xf32>
    %cst_48 = arith.constant 1.000000e-01 : f32
    %152 = vector.broadcast %cst_48 : f32 to vector<8x256xf32>
    %153 = arith.mulf %152, %151 : vector<8x256xf32>
    %154 = arith.maximumf %151, %153 : vector<8x256xf32>
    %c0_49 = arith.constant 0 : index
    %c0_50 = arith.constant 0 : index
    %c0_51 = arith.constant 0 : index
    %155 = vector.load %arg4[%c0_49, %c0_50, %c0_51] : memref<1x8x256xf32, #tpu.memory_space<vmem>>, vector<1x8x256xf32>
    %156 = vector.shape_cast %155 : vector<1x8x256xf32> to vector<8x256xf32>
    %157 = vector.shape_cast %154 : vector<8x256xf32> to vector<1x8x256xf32>
    tpu.vector_store %arg4[%c0_49, %c0_50, %c0_51], %157 {strides = array<i32>} : memref<1x8x256xf32, #tpu.memory_space<vmem>>, vector<1x8x256xf32>,
    return
  }
  func.func @transform_0(%arg0: i32) -> (i32, i32, i32) {
    %c0_i32 = arith.constant 0 : i32
    %c0_i32_0 = arith.constant 0 : i32
    %c0_i32_1 = arith.constant 0 : i32
    return %arg0, %c0_i32, %c0_i32_0 : i32, i32, i32
  }
  func.func @transform_1(%arg0: i32) -> (i32, i32) {
    %c0_i32 = arith.constant 0 : i32
    %c0_i32_0 = arith.constant 0 : i32
    %c0_i32_1 = arith.constant 0 : i32
    return %c0_i32, %c0_i32_0 : i32, i32
  }
  func.func @transform_2(%arg0: i32) -> (i32, i32) {
    %c0_i32 = arith.constant 0 : i32
    %c0_i32_0 = arith.constant 0 : i32
    %c0_i32_1 = arith.constant 0 : i32
    return %c0_i32, %c0_i32_0 : i32, i32
  }
  func.func @transform_3(%arg0: i32) -> (i32, i32, i32) {
    %c0_i32 = arith.constant 0 : i32
    %c0_i32_0 = arith.constant 0 : i32
    %c0_i32_1 = arith.constant 0 : i32
    return %arg0, %c0_i32, %c0_i32_0 : i32, i32, i32
  }
}

</mosaic_0001>

<llo_original>
// kernel: atrous_vggnet_block.1
$region0: #{atrous_vggnet_block.1}
  #allocation0 [shape = 'u32[]', space=smem, size = 0x4, offset = 0x4, fixed_abs, tag = 'smem constant byte address 0x4 - core index']
  #allocation1 [shape = 'u32[72,128]{1,0:T(1,128)}', space=vmem, size = 0x9000, scoped, tag = 'internal scratch']
  %s0 = inlined_call_operand.vmem [shape: f32[2,4,256], index: 0, kind: input, shape index: {}]
  %s1 = inlined_call_operand.vmem [shape: bf16[8,36], index: 1, kind: input, shape index: {}]
  %s2 = inlined_call_operand.vmem [shape: bf16[8,72], index: 2, kind: input, shape index: {}]
  %s3 = inlined_call_operand.vmem [shape: f32[2,8,256], index: 3, kind: output, shape index: {}]
  %s4 = sld [smem:[#allocation0]]
  $region45: #{atrous_vggnet_block.1} parent=0
    _
  %s6 = ssub.s32 1, %s4
  %s7 = scalar_select 0, %s6, %s4
  loop: start=0, step=1, limit=4
  $region2: #{atrous_vggnet_block.1} parent=0 // loop_pre_header
    _
  $region3: #{atrous_vggnet_block.1} parent=0 // loop_header
    %s9 = sphi 0, %s13
    %p10 = scmp.ge.s32.totalorder %s9, 4
    %s19 = sphi 0, %s21
    %s22 = sphi 0, %s19
    %s23 = sphi 0, %s22
    %s39 = sphi 0, %s23
    %s43 = sphi 0, %s43
    %s45 = sphi 0, %s43
    %s46 = sphi 0, %s45
    %s60 = sphi 0, %s46
    %s64 = sphi 0, %s64
    %s66 = sphi 0, %s64
    %s67 = sphi 0, %s66
    %s81 = sphi 0, %s67
    %s87 = sphi 0, %s89
    %s90 = sphi 0, %s87
    %s91 = sphi 0, %s90
    %s107 = sphi 0, %s91
  $region4: #{atrous_vggnet_block.1} parent=0 // loop_header_branch
    %12 = sbr.rel (%p10) target = $region8
  $region5: #{atrous_vggnet_block.1} parent=0 // loop_body
    %s14 = ssub.s32 %s9, 1
    %s15 = ssub.s32 %s9, 2
    %s16 = sadd.s32 %s9, 1
    %s17 = ssub.s32 %s9, %s16
    %p18 = scmp.eq.s32.totalorder %s17, 0
    %s20 = sadd.s32 %s19, 1
    %s21 = scalar_select %p18, %s19, %s20
    %p24 = pneg %p18
    %p25 = scmp.eq.s32.totalorder %s9, 1
    %p26 = por %p24, %p25
    %p27 = scmp.ne.s32.totalorder %s19, %s22
    %p28 = scmp.eq.s32.totalorder %s9, 0
    %p29 = por %p27, %p28
    %p30 = scmp.ne.s32.totalorder %s19, %s22
    %p31 = scmp.eq.s32.totalorder %s14, 1
    %p32 = por %p30, %p31
    %p33 = scmp.ne.s32.totalorder %s22, %s23
    %p34 = scmp.eq.s32.totalorder %s14, 0
    %p35 = por %p33, %p34
    %p36 = scmp.ne.s32.totalorder %s22, %s23
    %p37 = scmp.eq.s32.totalorder %s15, 1
    %p38 = por %p36, %p37
    %p40 = scmp.ne.s32.totalorder %s23, %s39
    %p41 = scmp.eq.s32.totalorder %s15, 0
    %p42 = por %p40, %p41
    %s44 = sadd.s32 %s43, 1
    %p47 = scmp.eq.s32.totalorder %s9, 1
    %p48 = scmp.ne.s32.totalorder %s43, %s45
    %p49 = scmp.eq.s32.totalorder %s9, 0
    %p50 = por %p48, %p49
    %p51 = scmp.ne.s32.totalorder %s43, %s45
    %p52 = scmp.eq.s32.totalorder %s14, 1
    %p53 = por %p51, %p52
    %p54 = scmp.ne.s32.totalorder %s45, %s46
    %p55 = scmp.eq.s32.totalorder %s14, 0
    %p56 = por %p54, %p55
    %p57 = scmp.ne.s32.totalorder %s45, %s46
    %p58 = scmp.eq.s32.totalorder %s15, 1
    %p59 = por %p57, %p58
    %p61 = scmp.ne.s32.totalorder %s46, %s60
    %p62 = scmp.eq.s32.totalorder %s15, 0
    %p63 = por %p61, %p62
    %s65 = sadd.s32 %s64, 1
    %p68 = scmp.eq.s32.totalorder %s9, 1
    %p69 = scmp.ne.s32.totalorder %s64, %s66
    %p70 = scmp.eq.s32.totalorder %s9, 0
    %p71 = por %p69, %p70
    %p72 = scmp.ne.s32.totalorder %s64, %s66
    %p73 = scmp.eq.s32.totalorder %s14, 1
    %p74 = por %p72, %p73
    %p75 = scmp.ne.s32.totalorder %s66, %s67
    %p76 = scmp.eq.s32.totalorder %s14, 0
    %p77 = por %p75, %p76
    %p78 = scmp.ne.s32.totalorder %s66, %s67
    %p79 = scmp.eq.s32.totalorder %s15, 1
    %p80 = por %p78, %p79
    %p82 = scmp.ne.s32.totalorder %s67, %s81
    %p83 = scmp.eq.s32.totalorder %s15, 0
    %p84 = por %p82, %p83
    %s85 = ssub.s32 %s9, %s16
    %p86 = scmp.eq.s32.totalorder %s85, 0
    %s88 = sadd.s32 %s87, 1
    %s89 = scalar_select %p86, %s87, %s88
    %p92 = pneg %p86
    %p93 = scmp.eq.s32.totalorder %s9, 1
    %p94 = por %p92, %p93
    %p95 = scmp.ne.s32.totalorder %s87, %s90
    %p96 = scmp.eq.s32.totalorder %s9, 0
    %p97 = por %p95, %p96
    %p98 = scmp.ne.s32.totalorder %s87, %s90
    %p99 = scmp.eq.s32.totalorder %s14, 1
    %p100 = por %p98, %p99
    %p101 = scmp.ne.s32.totalorder %s90, %s91
    %p102 = scmp.eq.s32.totalorder %s14, 0
    %p103 = por %p101, %p102
    %p104 = scmp.ne.s32.totalorder %s90, %s91
    %p105 = scmp.eq.s32.totalorder %s15, 1
    %p106 = por %p104, %p105
    %p108 = scmp.ne.s32.totalorder %s91, %s107
    %p109 = scmp.eq.s32.totalorder %s15, 0
    %p110 = por %p108, %p109
    %p111 = scmp.le.s32.totalorder 1, %s9
    %p112 = scmp.lt.s32.totalorder %s9, 3
    %p113 = pnand %p111, %p112
    %p114 = pneg %p113
    // Predicated region
    $region9: #{atrous_vggnet_block.1} parent=5 // pred_check
      _
    $region10: #{atrous_vggnet_block.1} parent=5 // pred_check_branch
      %116 = sbr.rel (%p113) target = $region12
    $region11: #{atrous_vggnet_block.1} parent=5 // pred_region
      %s117 = ssub.s32 %s9, 1
      // Predicated region
      $region13: #{atrous_vggnet_block.1} parent=11 // pred_check
        %p118 = pneg %p56
      $region14: #{atrous_vggnet_block.1} parent=11 // pred_check_branch
        %120 = sbr.rel (%p118) target = $region16
      $region15: #{atrous_vggnet_block.1} parent=11 // pred_region
        _
      $region16: #{atrous_vggnet_block.1} parent=11 // pred_fallthru
        _
      // Predicated region
      $region17: #{atrous_vggnet_block.1} parent=11 // pred_check
        %p121 = pneg %p77
      $region18: #{atrous_vggnet_block.1} parent=11 // pred_check_branch
        %123 = sbr.rel (%p121) target = $region20
      $region19: #{atrous_vggnet_block.1} parent=11 // pred_region
        _
      $region20: #{atrous_vggnet_block.1} parent=11 // pred_fallthru
        _
    $region12: #{atrous_vggnet_block.1} parent=5 // pred_fallthru
      _
    %p124 = scmp.lt.s32.totalorder %s9, 2
    // Predicated region
    $region21: #{atrous_vggnet_block.1} parent=5 // pred_check
      %p125 = pneg %p124
    $region22: #{atrous_vggnet_block.1} parent=5 // pred_check_branch
      %127 = sbr.rel (%p125) target = $region24
    $region23: #{atrous_vggnet_block.1} parent=5 // pred_region
      // Predicated region
      $region25: #{atrous_vggnet_block.1} parent=23 // pred_check
        %p128 = pneg %p29
      $region26: #{atrous_vggnet_block.1} parent=23 // pred_check_branch
        %130 = sbr.rel (%p128) target = $region28
      $region27: #{atrous_vggnet_block.1} parent=23 // pred_region
        %p131 = scmp.lt.s32.totalorder %s9, 1
        %s132 = scalar_select %p131, %s9, 1
        %s133 = smul.addr %s132, 2
        %s134 = smul.addr %s133, 4
        %s135 = scalar_lea.vmem %s0, %s134
      $region28: #{atrous_vggnet_block.1} parent=23 // pred_fallthru
        _
    $region24: #{atrous_vggnet_block.1} parent=5 // pred_fallthru
      _
    %p136 = scmp.le.s32.totalorder 1, %s9
    %p137 = scmp.lt.s32.totalorder %s9, 3
    %p138 = pnand %p136, %p137
    %p139 = pneg %p138
    // Predicated region
    $region29: #{atrous_vggnet_block.1} parent=5 // pred_check
      _
    $region30: #{atrous_vggnet_block.1} parent=5 // pred_check_branch
      %141 = sbr.rel (%p138) target = $region32
    $region31: #{atrous_vggnet_block.1} parent=5 // pred_region
      %s142 = ssub.s32 %s9, 1
      %p143 = scmp.lt.s32.totalorder %s14, 1
      %s144 = scalar_select %p143, %s14, 1
      %s145 = smul.addr %s144, 2
      %s146 = smul.addr %s145, 4
      %s147 = scalar_lea.vmem %s0, %s146
      %p148 = pneg %p35
      %p149 = pneg %p32
      %p150 = pneg %p56
      %p151 = pneg %p53
      %p152 = pneg %p77
      %p153 = pneg %p74
      %p154 = pneg %p103
      %p155 = pneg %p100
      %p156 = scmp.lt.s32.totalorder %s14, 1
      %s157 = scalar_select %p156, %s14, 1
      %s158 = smul.addr %s157, 2
      %s159 = smul.addr %s158, 8
      %s160 = scalar_lea.vmem %s3, %s159
      %p161 = scmp.lt.s32.totalorder %s14, 1
      %s162 = scalar_select %p161, %s14, 1
      %s163 = smul.addr %s162, 2
      %s164 = smul.addr %s163, 4
      %s165 = scalar_lea.vmem %s0, %s164
      %p166 = scmp.lt.s32.totalorder %s14, 1
      %s167 = scalar_select %p166, %s14, 1
      %s168 = smul.addr %s167, 2
      %s169 = smul.addr %s168, 8
      %s170 = scalar_lea.vmem %s3, %s169
      %v172 = vlaneseq
      %v173 = vand.u32 %v172, 127
      %v174 = vadd.s32 %v173, 128
      %v175 = vand.u32 %v173, 15
      %v176 = vand.u32 %v174, 15
      %v177 = vld [vmem:[%s1] sm:$0xf]
      %v178 = vld [vmem:[%s2] sm:$0xf]
      %v179 = vld [vmem:[%s165] sm:$0xff]
      %181 = vst [vmem:[#allocation1] ss:$2 sm:$0xff] %v179
      %v182 = vld.sshfl [vmem:[#allocation1] sm:$0xff pattern:$0x75316420]
      %v183 = vld.sshfl [vmem:[#allocation1 + $0x8] sm:$0xff pattern:$0x75316420]
      %186 = vrot.lane.b32.xlu0 %v182, 17
      %v187 = vpop.permute.xlu0 %186
      %188 = vrot.lane.b32.xlu0 %v183, 17
      %v189 = vpop.permute.xlu0 %188
      %vm190 = vcmp.lt.s32.totalorder %v173, 17
      %v191 = vsel %vm190, %v187, %v189
      %v192 = vsel %vm190, %v189, %v187
      %vm193 = vcmp.ge.s32.totalorder %v173, 16
      %vm194 = vcmp.ge.s32.totalorder %v174, 16
      %vm195 = vcmp.ge.s32.totalorder %v175, 1
      %vm196 = vcmp.ge.s32.totalorder %v176, 1
      %vm197 = vmand %vm193, %vm195
      %vm198 = vmand %vm194, %vm196
      %v199 = vsel %vm197, 1, 0
      %v200 = vsel %vm198, 1, 0
      %vm201 = vcmp.eq.s32.totalorder %v199, 1
      %vm202 = vcmp.eq.s32.totalorder %v200, 1
      %v203 = vsel %vm201, %v192, 0.0
      %v204 = vsel %vm202, %v191, 0.0
      %205 = vst [vmem:[#allocation1] ss:$2 sm:$0xff] %v179
      %v206 = vld.sshfl [vmem:[#allocation1] sm:$0xff pattern:$0x75316420]
      %v207 = vld.sshfl [vmem:[#allocation1 + $0x8] sm:$0xff pattern:$0x75316420]
      %210 = vrot.lane.b32.xlu0 %v206, 16
      %v211 = vpop.permute.xlu0 %210
      %212 = vrot.lane.b32.xlu0 %v207, 16
      %v213 = vpop.permute.xlu0 %212
      %vm214 = vcmp.lt.s32.totalorder %v173, 16
      %v215 = vsel %vm214, %v211, %v213
      %v216 = vsel %vm214, %v213, %v211
      %v217 = vsel %vm193, 1, 0
      %v218 = vsel %vm194, 1, 0
      %vm219 = vcmp.eq.s32.totalorder %v217, 1
      %vm220 = vcmp.eq.s32.totalorder %v218, 1
      %v221 = vsel %vm219, %v216, 0.0
      %v222 = vsel %vm220, %v215, 0.0
      %223 = vst [vmem:[#allocation1] ss:$2 sm:$0xff] %v179
      %v224 = vld.sshfl [vmem:[#allocation1] sm:$0xff pattern:$0x75316420]
      %v225 = vld.sshfl [vmem:[#allocation1 + $0x8] sm:$0xff pattern:$0x75316420]
      %228 = vrot.lane.b32.xlu0 %v224, 15
      %v229 = vpop.permute.xlu0 %228
      %230 = vrot.lane.b32.xlu0 %v225, 15
      %v231 = vpop.permute.xlu0 %230
      %vm232 = vcmp.lt.s32.totalorder %v173, 15
      %v233 = vsel %vm232, %v229, %v231
      %v234 = vsel %vm232, %v231, %v229
      %vm235 = vcmp.lt.s32.totalorder %v175, 15
      %vm236 = vcmp.lt.s32.totalorder %v176, 15
      %vm237 = vmand %vm193, %vm235
      %vm238 = vmand %vm194, %vm236
      %v239 = vsel %vm237, 1, 0
      %v240 = vsel %vm238, 1, 0
      %vm241 = vcmp.eq.s32.totalorder %v239, 1
      %vm242 = vcmp.eq.s32.totalorder %v240, 1
      %v243 = vsel %vm241, %v234, 0.0
      %v244 = vsel %vm242, %v233, 0.0
      %245 = vst [vmem:[#allocation1] ss:$2 sm:$0xff] %v179
      %v246 = vld.sshfl [vmem:[#allocation1] sm:$0xff pattern:$0x75316420]
      %v247 = vld.sshfl [vmem:[#allocation1 + $0x8] sm:$0xff pattern:$0x75316420]
      %250 = vrot.lane.b32.xlu0 %v246, 1
      %v251 = vpop.permute.xlu0 %250
      %252 = vrot.lane.b32.xlu0 %v247, 1
      %v253 = vpop.permute.xlu0 %252
      %vm254 = vcmp.lt.s32.totalorder %v173, 1
      %v255 = vsel %vm254, %v251, %v253
      %v256 = vsel %vm254, %v253, %v251
      %v257 = vsel %vm195, 1, 0
      %v258 = vsel %vm196, 1, 0
      %vm259 = vcmp.eq.s32.totalorder %v257, 1
      %vm260 = vcmp.eq.s32.totalorder %v258, 1
      %v261 = vsel %vm259, %v256, 0.0
      %v262 = vsel %vm260, %v255, 0.0
      %263 = vst [vmem:[#allocation1] ss:$2 sm:$0xff] %v179
      %v264 = vld.sshfl [vmem:[#allocation1] sm:$0xff pattern:$0x75316420]
      %v265 = vld.sshfl [vmem:[#allocation1 + $0x8] sm:$0xff pattern:$0x75316420]
      %268 = vrot.lane.b32.xlu0 %v264, 127
      %v269 = vpop.permute.xlu0 %268
      %270 = vrot.lane.b32.xlu0 %v265, 127
      %v271 = vpop.permute.xlu0 %270
      %vm272 = vcmp.lt.s32.totalorder %v173, 127
      %v273 = vsel %vm272, %v269, %v271
      %v274 = vsel %vm272, %v271, %v269
      %v275 = vsel %vm235, 1, 0
      %v276 = vsel %vm236, 1, 0
      %vm277 = vcmp.eq.s32.totalorder %v275, 1
      %vm278 = vcmp.eq.s32.totalorder %v276, 1
      %v279 = vsel %vm277, %v273, 0.0
      %v280 = vsel %vm278, %v274, 0.0
      %281 = vst [vmem:[#allocation1] ss:$2 sm:$0xff] %v179
      %v282 = vld.sshfl [vmem:[#allocation1] sm:$0xff pattern:$0x75316420]
      %v283 = vld.sshfl [vmem:[#allocation1 + $0x8] sm:$0xff pattern:$0x75316420]
      %286 = vrot.lane.b32.xlu0 %v282, 113
      %v287 = vpop.permute.xlu0 %286
      %288 = vrot.lane.b32.xlu0 %v283, 113
      %v289 = vpop.permute.xlu0 %288
      %vm290 = vcmp.lt.s32.totalorder %v173, 113
      %v291 = vsel %vm290, %v287, %v289
      %v292 = vsel %vm290, %v289, %v287
      %vm293 = vcmp.lt.s32.totalorder %v173, 240
      %vm294 = vcmp.lt.s32.totalorder %v174, 240
      %vm295 = vmand %vm293, %vm195
      %vm296 = vmand %vm294, %vm196
      %v297 = vsel %vm295, 1, 0
      %v298 = vsel %vm296, 1, 0
      %vm299 = vcmp.eq.s32.totalorder %v297, 1
      %vm300 = vcmp.eq.s32.totalorder %v298, 1
      %v301 = vsel %vm299, %v291, 0.0
      %v302 = vsel %vm300, %v292, 0.0
      %303 = vst [vmem:[#allocation1] ss:$2 sm:$0xff] %v179
      %v304 = vld.sshfl [vmem:[#allocation1] sm:$0xff pattern:$0x75316420]
      %v305 = vld.sshfl [vmem:[#allocation1 + $0x8] sm:$0xff pattern:$0x75316420]
      %308 = vrot.lane.b32.xlu0 %v304, 112
      %v309 = vpop.permute.xlu0 %308
      %310 = vrot.lane.b32.xlu0 %v305, 112
      %v311 = vpop.permute.xlu0 %310
      %vm312 = vcmp.lt.s32.totalorder %v173, 112
      %v313 = vsel %vm312, %v309, %v311
      %v314 = vsel %vm312, %v311, %v309
      %v315 = vsel %vm293, 1, 0
      %v316 = vsel %vm294, 1, 0
      %vm317 = vcmp.eq.s32.totalorder %v315, 1
      %vm318 = vcmp.eq.s32.totalorder %v316, 1
      %v319 = vsel %vm317, %v313, 0.0
      %v320 = vsel %vm318, %v314, 0.0
      %321 = vst [vmem:[#allocation1] ss:$2 sm:$0xff] %v179
      %v322 = vld.sshfl [vmem:[#allocation1] sm:$0xff pattern:$0x75316420]
      %v323 = vld.sshfl [vmem:[#allocation1 + $0x8] sm:$0xff pattern:$0x75316420]
      %326 = vrot.lane.b32.xlu0 %v322, 111
      %v327 = vpop.permute.xlu0 %326
      %328 = vrot.lane.b32.xlu0 %v323, 111
      %v329 = vpop.permute.xlu0 %328
      %vm330 = vcmp.lt.s32.totalorder %v173, 111
      %v331 = vsel %vm330, %v327, %v329
      %v332 = vsel %vm330, %v329, %v327
      %vm333 = vmand %vm293, %vm235
      %vm334 = vmand %vm294, %vm236
      %v335 = vsel %vm333, 1, 0
      %v336 = vsel %vm334, 1, 0
      %vm337 = vcmp.eq.s32.totalorder %v335, 1
      %vm338 = vcmp.eq.s32.totalorder %v336, 1
      %v339 = vsel %vm337, %v331, 0.0
      %v340 = vsel %vm338, %v332, 0.0
      %v343 = vrot.slane %v221, 4
      %v344 = vrot.slane %v222, 4
      %v349 = vrot.slane %v261, 4
      %v350 = vrot.slane %v262, 4
      %353 = vst [vmem:[#allocation1] ss:$2 sm:$0xff] %v179
      %v354 = vld.sshfl [vmem:[#allocation1] sm:$0xff pattern:$0x75316420]
      %v355 = vld.sshfl [vmem:[#allocation1 + $0x8] sm:$0xff pattern:$0x75316420]
      %v360 = vrot.slane %v279, 4
      %v361 = vrot.slane %v280, 4
      %v366 = vrot.slane %v319, 4
      %v367 = vrot.slane %v320, 4
      %vm370 = vcmask 1043456
      %v371 = vsel %vm370, %v203, %v343
      %v372 = vsel %vm370, %v204, %v344
      %v373 = vsel %vm370, %v243, %v349
      %v374 = vsel %vm370, %v244, %v350
      %v375 = vsel %vm370, %v354, %v360
      %v376 = vsel %vm370, %v355, %v361
      %v377 = vsel %vm370, %v301, %v366
      %v378 = vsel %vm370, %v302, %v367
      %v379 = vpack.c.bf16 %v373, %v371
      %v380 = vpack.c.bf16 %v374, %v372
      %v381 = vpack.c.bf16 %v377, %v375
      %v382 = vpack.c.bf16 %v378, %v376
      %v383 = vpack.c.bf16 %v339, %v339
      %v384 = vpack.c.bf16 %v340, %v340
      %vm385 = vcmask 293888
      %v387 = vsel %vm385, %v177, 0
      %vm389 = vcmask 1041408
      %v391 = vsel %vm389, %v383, 0
      %v394 = vsel %vm389, %v384, 0
      %396 = vmatpush.bf16.msra.mxu0 0
      %397 = vmatpush.bf16.msra.mxu0 0
      %398 = vmatpush.bf16.msra.mxu0 0
      %399 = vmatpush.bf16.msra.mxu0 0
      %400 = vmatpush.bf16.msra.mxu0 0
      %401 = vmatpush.bf16.msra.mxu0 %v391
      %402 = vmatpush.bf16.msra.mxu0 %v381
      %403 = vmatpush.bf16.msra.mxu0 %v379
      %404 = vmatmul.bf16.gmra.mxu0 %v387
      %v405 = vpop.f32.mrf.mxu0
      %v406 = vadd.f32 0.0, %v405
      %v407 = vpop.f32.mrf.mxu0
      %408 = vdwg.mxu0
      %409 = vmatpush.bf16.msra.mxu0 0
      %410 = vmatpush.bf16.msra.mxu0 0
      %411 = vmatpush.bf16.msra.mxu0 0
      %412 = vmatpush.bf16.msra.mxu0 0
      %413 = vmatpush.bf16.msra.mxu0 0
      %414 = vmatpush.bf16.msra.mxu0 %v394
      %415 = vmatpush.bf16.msra.mxu0 %v382
      %416 = vmatpush.bf16.msra.mxu0 %v380
      %417 = vmatmul.bf16.gmra.mxu0 %v387
      %v418 = vpop.f32.mrf.mxu0
      %v419 = vadd.f32 0.0, %v418
      %v420 = vpop.f32.mrf.mxu0
      %421 = vdwg.mxu0
      %v422 = vmul.f32 %v406, 0.1
      %v423 = vmul.f32 %v419, 0.1
      %v424 = vmax.f32 %v406, %v422
      %v425 = vmax.f32 %v419, %v423
      %426 = vrot.lane.b32.xlu0 %v424, 34
      %v427 = vpop.permute.xlu0 %426
      %428 = vrot.lane.b32.xlu0 %v425, 34
      %v429 = vpop.permute.xlu0 %428
      %vm430 = vcmp.lt.s32.totalorder %v173, 34
      %v431 = vsel %vm430, %v427, %v429
      %v432 = vsel %vm430, %v429, %v427
      %vm433 = vcmp.ge.s32.totalorder %v173, 32
      %vm434 = vcmp.ge.s32.totalorder %v174, 32
      %vm435 = vcmp.ge.s32.totalorder %v175, 2
      %vm436 = vcmp.ge.s32.totalorder %v176, 2
      %vm437 = vmand %vm433, %vm435
      %vm438 = vmand %vm434, %vm436
      %v439 = vsel %vm437, 1, 0
      %v440 = vsel %vm438, 1, 0
      %vm441 = vcmp.eq.s32.totalorder %v439, 1
      %vm442 = vcmp.eq.s32.totalorder %v440, 1
      %v443 = vsel %vm441, %v432, 0.0
      %v444 = vsel %vm442, %v431, 0.0
      %445 = vrot.lane.b32.xlu0 %v424, 32
      %v446 = vpop.permute.xlu0 %445
      %447 = vrot.lane.b32.xlu0 %v425, 32
      %v448 = vpop.permute.xlu0 %447
      %vm449 = vcmp.lt.s32.totalorder %v173, 32
      %v450 = vsel %vm449, %v446, %v448
      %v451 = vsel %vm449, %v448, %v446
      %v452 = vsel %vm433, 1, 0
      %v453 = vsel %vm434, 1, 0
      %vm454 = vcmp.eq.s32.totalorder %v452, 1
      %vm455 = vcmp.eq.s32.totalorder %v453, 1
      %v456 = vsel %vm454, %v451, 0.0
      %v457 = vsel %vm455, %v450, 0.0
      %458 = vrot.lane.b32.xlu0 %v424, 30
      %v459 = vpop.permute.xlu0 %458
      %460 = vrot.lane.b32.xlu0 %v425, 30
      %v461 = vpop.permute.xlu0 %460
      %vm462 = vcmp.lt.s32.totalorder %v173, 30
      %v463 = vsel %vm462, %v459, %v461
      %v464 = vsel %vm462, %v461, %v459
      %vm465 = vcmp.lt.s32.totalorder %v175, 14
      %vm466 = vcmp.lt.s32.totalorder %v176, 14
      %vm467 = vmand %vm433, %vm465
      %vm468 = vmand %vm434, %vm466
      %v469 = vsel %vm467, 1, 0
      %v470 = vsel %vm468, 1, 0
      %vm471 = vcmp.eq.s32.totalorder %v469, 1
      %vm472 = vcmp.eq.s32.totalorder %v470, 1
      %v473 = vsel %vm471, %v464, 0.0
      %v474 = vsel %vm472, %v463, 0.0
      %475 = vrot.lane.b32.xlu0 %v424, 2
      %v476 = vpop.permute.xlu0 %475
      %477 = vrot.lane.b32.xlu0 %v425, 2
      %v478 = vpop.permute.xlu0 %477
      %vm479 = vcmp.lt.s32.totalorder %v173, 2
      %v480 = vsel %vm479, %v476, %v478
      %v481 = vsel %vm479, %v478, %v476
      %v482 = vsel %vm435, 1, 0
      %v483 = vsel %vm436, 1, 0
      %vm484 = vcmp.eq.s32.totalorder %v482, 1
      %vm485 = vcmp.eq.s32.totalorder %v483, 1
      %v486 = vsel %vm484, %v481, 0.0
      %v487 = vsel %vm485, %v480, 0.0
      %488 = vrot.lane.b32.xlu0 %v424, 126
      %v489 = vpop.permute.xlu0 %488
      %490 = vrot.lane.b32.xlu0 %v425, 126
      %v491 = vpop.permute.xlu0 %490
      %vm492 = vcmp.lt.s32.totalorder %v173, 126
      %v493 = vsel %vm492, %v489, %v491
      %v494 = vsel %vm492, %v491, %v489
      %v495 = vsel %vm465, 1, 0
      %v496 = vsel %vm466, 1, 0
      %vm497 = vcmp.eq.s32.totalorder %v495, 1
      %vm498 = vcmp.eq.s32.totalorder %v496, 1
      %v499 = vsel %vm497, %v493, 0.0
      %v500 = vsel %vm498, %v494, 0.0
      %501 = vrot.lane.b32.xlu0 %v424, 98
      %v502 = vpop.permute.xlu0 %501
      %503 = vrot.lane.b32.xlu0 %v425, 98
      %v504 = vpop.permute.xlu0 %503
      %vm505 = vcmp.lt.s32.totalorder %v173, 98
      %v506 = vsel %vm505, %v502, %v504
      %v507 = vsel %vm505, %v504, %v502
      %vm508 = vcmp.lt.s32.totalorder %v173, 224
      %vm509 = vcmp.lt.s32.totalorder %v174, 224
      %vm510 = vmand %vm508, %vm435
      %vm511 = vmand %vm509, %vm436
      %v512 = vsel %vm510, 1, 0
      %v513 = vsel %vm511, 1, 0
      %vm514 = vcmp.eq.s32.totalorder %v512, 1
      %vm515 = vcmp.eq.s32.totalorder %v513, 1
      %v516 = vsel %vm514, %v506, 0.0
      %v517 = vsel %vm515, %v507, 0.0
      %518 = vrot.lane.b32.xlu0 %v424, 96
      %v519 = vpop.permute.xlu0 %518
      %520 = vrot.lane.b32.xlu0 %v425, 96
      %v521 = vpop.permute.xlu0 %520
      %vm522 = vcmp.lt.s32.totalorder %v173, 96
      %v523 = vsel %vm522, %v519, %v521
      %v524 = vsel %vm522, %v521, %v519
      %v525 = vsel %vm508, 1, 0
      %v526 = vsel %vm509, 1, 0
      %vm527 = vcmp.eq.s32.totalorder %v525, 1
      %vm528 = vcmp.eq.s32.totalorder %v526, 1
      %v529 = vsel %vm527, %v523, 0.0
      %v530 = vsel %vm528, %v524, 0.0
      %531 = vrot.lane.b32.xlu0 %v424, 94
      %v532 = vpop.permute.xlu0 %531
      %533 = vrot.lane.b32.xlu0 %v425, 94
      %v534 = vpop.permute.xlu0 %533
      %vm535 = vcmp.lt.s32.totalorder %v173, 94
      %v536 = vsel %vm535, %v532, %v534
      %v537 = vsel %vm535, %v534, %v532
      %vm538 = vmand %vm508, %vm465
      %vm539 = vmand %vm509, %vm466
      %v540 = vsel %vm538, 1, 0
      %v541 = vsel %vm539, 1, 0
      %vm542 = vcmp.eq.s32.totalorder %v540, 1
      %vm543 = vcmp.eq.s32.totalorder %v541, 1
      %v544 = vsel %vm542, %v536, 0.0
      %v545 = vsel %vm543, %v537, 0.0
      %v546 = vpack.c.bf16 %v456, %v443
      %v547 = vpack.c.bf16 %v457, %v444
      %v548 = vpack.c.bf16 %v486, %v473
      %v549 = vpack.c.bf16 %v487, %v474
      %v550 = vpack.c.bf16 %v499, %v424
      %v551 = vpack.c.bf16 %v500, %v425
      %v552 = vpack.c.bf16 %v529, %v516
      %v553 = vpack.c.bf16 %v530, %v517
      %v554 = vpack.c.bf16 %v544, %v544
      %v555 = vpack.c.bf16 %v545, %v545
      %vm556 = vcmask 588800
      %v558 = vsel %vm556, %v178, 0
      %v561 = vsel %vm370, %v554, 0
      %v564 = vsel %vm370, %v555, 0
      %566 = vmatpush.bf16.msra.mxu0 0
      %567 = vmatpush.bf16.msra.mxu0 0
      %568 = vmatpush.bf16.msra.mxu0 0
      %569 = vmatpush.bf16.msra.mxu0 %v561
      %570 = vmatpush.bf16.msra.mxu0 %v552
      %571 = vmatpush.bf16.msra.mxu0 %v550
      %572 = vmatpush.bf16.msra.mxu0 %v548
      %573 = vmatpush.bf16.msra.mxu0 %v546
      %574 = vmatmul.bf16.gmra.mxu0 %v558
      %v575 = vpop.f32.mrf.mxu0
      %v576 = vadd.f32 0.0, %v575
      %v577 = vpop.f32.mrf.mxu0
      %578 = vdwg.mxu0
      %579 = vmatpush.bf16.msra.mxu0 0
      %580 = vmatpush.bf16.msra.mxu0 0
      %581 = vmatpush.bf16.msra.mxu0 0
      %582 = vmatpush.bf16.msra.mxu0 %v564
      %583 = vmatpush.bf16.msra.mxu0 %v553
      %584 = vmatpush.bf16.msra.mxu0 %v551
      %585 = vmatpush.bf16.msra.mxu0 %v549
      %586 = vmatpush.bf16.msra.mxu0 %v547
      %587 = vmatmul.bf16.gmra.mxu0 %v558
      %v588 = vpop.f32.mrf.mxu0
      %v589 = vadd.f32 0.0, %v588
      %v590 = vpop.f32.mrf.mxu0
      %591 = vdwg.mxu0
      %v592 = vmul.f32 %v576, 0.1
      %v593 = vmul.f32 %v589, 0.1
      %v594 = vmax.f32 %v576, %v592
      %v595 = vmax.f32 %v589, %v593
      %596 = vst [vmem:[%s170] sm:$0xff] %v594
      %597 = vst [vmem:[%s170 + $0x8] sm:$0xff] %v595
      %p598 = scmp.lt.s32.totalorder %s14, 1
      %s599 = scalar_select %p598, %s14, 1
      %s600 = smul.addr %s599, 2
      %s601 = smul.addr %s600, 8
      %s602 = scalar_lea.vmem %s3, %s601
      // Predicated region
      $region33: #{atrous_vggnet_block.1} parent=31 // pred_check
        %p603 = pneg %p100
      $region34: #{atrous_vggnet_block.1} parent=31 // pred_check_branch
        %605 = sbr.rel (%p603) target = $region36
      $region35: #{atrous_vggnet_block.1} parent=31 // pred_region
        _
      $region36: #{atrous_vggnet_block.1} parent=31 // pred_fallthru
        _
    $region32: #{atrous_vggnet_block.1} parent=5 // pred_fallthru
      _
    %p606 = scmp.le.s32.totalorder 2, %s9
    // Predicated region
    $region37: #{atrous_vggnet_block.1} parent=5 // pred_check
      %p607 = pneg %p606
    $region38: #{atrous_vggnet_block.1} parent=5 // pred_check_branch
      %609 = sbr.rel (%p607) target = $region40
    $region39: #{atrous_vggnet_block.1} parent=5 // pred_region
      %s610 = ssub.s32 %s9, 2
      // Predicated region
      $region41: #{atrous_vggnet_block.1} parent=39 // pred_check
        %p611 = pneg %p106
      $region42: #{atrous_vggnet_block.1} parent=39 // pred_check_branch
        %613 = sbr.rel (%p611) target = $region44
      $region43: #{atrous_vggnet_block.1} parent=39 // pred_region
        %p614 = scmp.lt.s32.totalorder %s15, 1
        %s615 = scalar_select %p614, %s15, 1
        %s616 = smul.addr %s615, 2
        %s617 = smul.addr %s616, 8
        %s618 = scalar_lea.vmem %s3, %s617
      $region44: #{atrous_vggnet_block.1} parent=39 // pred_fallthru
        _
    $region40: #{atrous_vggnet_block.1} parent=5 // pred_fallthru
      _
  $region6: #{atrous_vggnet_block.1} parent=0 // loop_footer
    %s13 = sadd.s32 1, %s9
  $region7: #{atrous_vggnet_block.1} parent=0 // loop_footer_branch
    %8 = sbr.rel target = $region3
  $region8: #{atrous_vggnet_block.1} parent=0 // loop_exit
    _

</llo_original>
